<compile_context>
chip_gen: v5e
topology: v5e:2x2
jax: 0.10.0
libtpu: 0.0.40
codegen_flags: <defaults>
</compile_context>

<pallas_src>
import jax
import jax.numpy as jnp
from jax.experimental import pallas as pl
from jax.experimental.pallas import tpu as pltpu

_MXU_N = 256                                 # v6e/v7x MXU width (over-aligned, fine on v5e)
_WEIGHT_RESIDENT_BYTES = 16 * 1024 * 1024    # keep W fully VMEM-resident below this
_WEIGHT_TILE_BYTES = 8 * 1024 * 1024         # per-buffer budget when streaming class tiles


def _round_up(x: int, m: int) -> int:
    return ((x + m - 1) // m) * m


def _pick_class_tile(c_pad: int, d_dim: int, w_itemsize: int) -> int:
    """Class-dim tile: full width if the weight fits VMEM, else a <=8 MiB slab
    that is a multiple of 256 and divides the padded class dim."""
    if d_dim * c_pad * w_itemsize <= _WEIGHT_RESIDENT_BYTES:
        return c_pad
    tn = max(_MXU_N, (_WEIGHT_TILE_BYTES // (d_dim * w_itemsize)) // _MXU_N * _MXU_N)
    tn = min(tn, c_pad)
    while c_pad % tn:            # c_pad is a multiple of 256, so this terminates at >=256
        tn -= _MXU_N
    return tn


def _linear_kernel(x_ref, wt_ref, b_ref, o_ref):
    # x_ref:  [TM, D]  (f32 or bf16) -- cast to the weight dtype in-kernel
    # wt_ref: [D, TN]  bf16 (resident when TN == Cp)
    # b_ref:  [1, TN]  f32
    # o_ref:  [TM, TN]
    x = x_ref[...].astype(wt_ref.dtype)
    acc = jnp.dot(x, wt_ref[...], preferred_element_type=jnp.float32)
    o_ref[...] = (acc + b_ref[...]).astype(o_ref.dtype)


def prepare_classifier_params(weight, bias, class_mapping=None,
                              matmul_dtype=jnp.bfloat16):
    """One-time prep (called once per classifier, outside the eval loop).

    weight: [C, D] (PyTorch nn.Linear layout), bias: [C].
    Returns (wt [D, Cp] matmul_dtype, bias2d [1, Cp] f32, C_kept).
    """
    if class_mapping is not None:
        weight = weight[class_mapping]           # [M, D] -- gather BEFORE the matmul
        bias = bias[class_mapping]               # [M]
    c, _ = weight.shape
    c_pad = _round_up(c, _MXU_N)                 # lane-dense, full MXU width
    wt = jnp.pad(weight.T, ((0, 0), (0, c_pad - c))).astype(matmul_dtype)
    b2 = jnp.pad(bias, (0, c_pad - c)).reshape(1, c_pad).astype(jnp.float32)
    return wt, b2, c


def linear_classifier_pallas(x, wt, b2, *, block_m=256, out_dtype=jnp.float32):
    """x: [B, D], wt: [D, Cp], b2: [1, Cp] -> logits [B, Cp] (out_dtype)."""
    b_dim, d_dim = x.shape
    c_pad = wt.shape[1]
    w_itemsize = jnp.dtype(wt.dtype).itemsize
    x_itemsize = jnp.dtype(x.dtype).itemsize
    out_itemsize = jnp.dtype(out_dtype).itemsize

    # ---- batch (M) tiling --------------------------------------------------
    tm = min(block_m, _round_up(b_dim, 8))
    b_pad = _round_up(b_dim, tm)
    # Give v7x's two TensorCores >=2 grid steps when the whole batch fits one tile.
    if b_pad // tm == 1 and b_pad >= 16 and b_pad % 16 == 0:
        tm = b_pad // 2
    num_m = b_pad // tm
    if b_pad != b_dim:
        x = jnp.pad(x, ((0, b_pad - b_dim), (0, 0)))

    # ---- class (N) tiling --------------------------------------------------
    tn = _pick_class_tile(c_pad, d_dim, w_itemsize)
    num_n = c_pad // tn
    resident = num_n == 1
    # Resident weight/bias: constant index_map + single buffer (no second pipeline copy).
    wb_mode = dict(pipeline_mode=pl.Buffered(1)) if resident else {}

    in_specs = [
        pl.BlockSpec((tm, d_dim), lambda i, j: (i, 0)),            # x streams over batch
        pl.BlockSpec((d_dim, tn), lambda i, j: (0, j), **wb_mode),  # weight
        pl.BlockSpec((1, tn), lambda i, j: (0, j), **wb_mode),      # bias
    ]
    out_specs = pl.BlockSpec((tm, tn), lambda i, j: (i, j))

    # ---- VMEM budget ---------------------------------------------------------
    w_buffers = 1 if resident else 2
    vmem_bytes = (w_buffers * d_dim * tn * w_itemsize       # weight buffer(s)
                  + 2 * tn * 4                               # bias
                  + 2 * tm * d_dim * x_itemsize              # double-buffered x tiles
                  + 2 * tm * tn * out_itemsize               # double-buffered out tiles
                  + (4 << 20))                               # headroom / compiler scratch
    vmem_limit = int(min(64 << 20, max(vmem_bytes, 16 << 20)))

    cost = pl.CostEstimate(
        flops=2 * b_pad * d_dim * c_pad,
        transcendentals=0,
        bytes_accessed=(b_pad * d_dim * x_itemsize
                        + d_dim * c_pad * w_itemsize * (1 if resident else num_m)
                        + c_pad * 4
                        + b_pad * c_pad * out_itemsize),
    )

    # NOTE: on v7x, pltpu.CORE_PARALLEL on the batch axis shards grid steps
    # across the two TensorCores explicitly; plain "parallel" is used here so
    # the same code compiles on single-TC v5e/v6e.
    out = pl.pallas_call(
        _linear_kernel,
        out_shape=jax.ShapeDtypeStruct((b_pad, c_pad), out_dtype),
        grid_spec=pltpu.PrefetchScalarGridSpec(
            num_scalar_prefetch=0,
            grid=(num_m, num_n),
            in_specs=in_specs,
            out_specs=out_specs,
        ),
        compiler_params=pltpu.CompilerParams(
            dimension_semantics=("parallel", "parallel"),
            vmem_limit_bytes=vmem_limit,
        ),
        cost_estimate=cost,
    )(x, wt, b2)
    return out if b_pad == b_dim else out[:b_dim]


def make_linear_postprocessor(weight, bias, class_mapping=None, *,
                              matmul_dtype=jnp.bfloat16,
                              out_dtype=jnp.float32,
                              block_m=256):
    """Build the LinearPostprocessor.forward equivalent.

    Weight gather/transpose/pad/cast happens ONCE here (hoisted out of the
    per-batch forward).  Use out_dtype=jnp.bfloat16 on v7x to halve the logits
    writeback when only top-k / argmax metrics are needed.
    """
    wt, b2, c_kept = prepare_classifier_params(weight, bias, class_mapping,
                                               matmul_dtype)

    @jax.jit
    def forward(samples, targets):
        preds = linear_classifier_pallas(samples, wt, b2,
                                         block_m=block_m, out_dtype=out_dtype)
        if preds.shape[1] != c_kept:
            preds = preds[:, :c_kept]        # strip class-dim padding
        return {"preds": preds, "target": targets}

    return forward


if __name__ == "__main__":
    key = jax.random.PRNGKey(0)
    k_x, k_w, k_t = jax.random.split(key, 3)

    B, D, C = 8, 32, 16          # small batch, feature dim, num classes
    NUM_MAPPED = 10

    samples = jax.random.normal(k_x, (B, D), dtype=jnp.float32)
    targets = jax.random.randint(k_t, (B,), 0, NUM_MAPPED, dtype=jnp.int32)

    # dinov2 LinearClassifier init: weight ~ N(0, 0.01), bias = 0
    weight = 0.01 * jax.random.normal(k_w, (C, D), dtype=jnp.float32)
    bias = jnp.zeros((C,), dtype=jnp.float32)

    # class_mapping buffer (LongTensor in torch -> int32 indices here)
    class_mapping = jnp.arange(NUM_MAPPED, dtype=jnp.int32)[::-1]

    postprocess = make_linear_postprocessor(weight, bias, class_mapping)
    out = postprocess(samples, targets)
    jax.block_until_ready(out["preds"])
    jax.block_until_ready(out["target"])

    assert out["preds"].shape == (B, NUM_MAPPED)
    assert out["target"].shape == (B,)

    # Reference 1: exact bf16-cast path (f32 accumulation), like the kernel.
    w_sel = weight[class_mapping]
    b_sel = bias[class_mapping]
    ref_bf16 = (samples.astype(jnp.bfloat16).astype(jnp.float32)
                @ w_sel.T.astype(jnp.bfloat16).astype(jnp.float32) + b_sel)
    # Reference 2: original module semantics in f32 (full linear then column gather).
    ref_f32 = (samples @ weight.T + bias)[:, class_mapping]

    assert jnp.allclose(out["preds"], ref_bf16, atol=1e-4, rtol=1e-3)
    assert jnp.allclose(out["preds"], ref_f32, atol=2e-3, rtol=3e-2)
    assert jnp.array_equal(out["target"], targets)

    print("KERNEL_OK")
</pallas_src>

<mosaic_0001>
module attributes {stable_mosaic.version = 11 : i64} {
  func.func @_linear_kernel(%arg0: i32, %arg1: i32, %arg2: memref<8x32xf32, #tpu.memory_space<vmem>>, %arg3: memref<32x256xbf16, #tpu.memory_space<vmem>>, %arg4: memref<1x256xf32, #tpu.memory_space<vmem>>, %arg5: memref<8x256xf32, #tpu.memory_space<vmem>>) attributes {dimension_semantics = [#tpu.dimension_semantics<parallel>, #tpu.dimension_semantics<parallel>], iteration_bounds = array<i64: 1, 1>, scalar_prefetch = 0 : i64, scratch_operands = 0 : i64, tpu.core_type = #tpu.core_type<tc>, window_params = [{transform_indices = @transform_0, window_bounds = array<i64: 8, 32>}, {pipeline_mode = #tpu.pipeline_mode<synchronous>, transform_indices = @transform_1, window_bounds = array<i64: 32, 256>}, {pipeline_mode = #tpu.pipeline_mode<synchronous>, transform_indices = @transform_2, window_bounds = array<i64: 1, 256>}, {transform_indices = @transform_3, window_bounds = array<i64: 8, 256>}]} {
    %c0 = arith.constant 0 : index
    %c0_0 = arith.constant 0 : index
    %0 = vector.load %arg2[%c0, %c0_0] : memref<8x32xf32, #tpu.memory_space<vmem>>, vector<8x32xf32>
    %1 = arith.truncf %0 : vector<8x32xf32> to vector<8x32xbf16>
    %c0_1 = arith.constant 0 : index
    %c0_2 = arith.constant 0 : index
    %2 = vector.load %arg3[%c0_1, %c0_2] : memref<32x256xbf16, #tpu.memory_space<vmem>>, vector<32x256xbf16>
    %cst = arith.constant dense<0.000000e+00> : vector<8x256xf32>
    %3 = tpu.matmul %1, %2, %cst {dimension_numbers = #tpu.dot_dimension_numbers<[1], [0], [0], [1], [0, 0, 1, 1], [], []>} : vector<8x32xbf16>, vector<32x256xbf16>, vector<8x256xf32> -> vector<8x256xf32>
    %c0_3 = arith.constant 0 : index
    %c0_4 = arith.constant 0 : index
    %4 = vector.load %arg4[%c0_3, %c0_4] : memref<1x256xf32, #tpu.memory_space<vmem>>, vector<1x256xf32>
    %5 = vector.broadcast %4 : vector<1x256xf32> to vector<8x256xf32>
    %6 = arith.addf %3, %5 : vector<8x256xf32>
    %c0_5 = arith.constant 0 : index
    %c0_6 = arith.constant 0 : index
    %7 = vector.load %arg5[%c0_5, %c0_6] : memref<8x256xf32, #tpu.memory_space<vmem>>, vector<8x256xf32>
    tpu.vector_store %arg5[%c0_5, %c0_6], %6 {strides = array<i32>} : memref<8x256xf32, #tpu.memory_space<vmem>>, vector<8x256xf32>,
    return
  }
  func.func @transform_0(%arg0: i32, %arg1: i32) -> (i32, i32) {
    %c0_i32 = arith.constant 0 : i32
    %c0_i32_0 = arith.constant 0 : i32
    return %arg0, %c0_i32 : i32, i32
  }
  func.func @transform_1(%arg0: i32, %arg1: i32) -> (i32, i32) {
    %c0_i32 = arith.constant 0 : i32
    %c0_i32_0 = arith.constant 0 : i32
    return %c0_i32, %arg1 : i32, i32
  }
  func.func @transform_2(%arg0: i32, %arg1: i32) -> (i32, i32) {
    %c0_i32 = arith.constant 0 : i32
    %c0_i32_0 = arith.constant 0 : i32
    return %c0_i32, %arg1 : i32, i32
  }
  func.func @transform_3(%arg0: i32, %arg1: i32) -> (i32, i32) {
    %c0_i32 = arith.constant 0 : i32
    return %arg0, %arg1 : i32, i32
  }
}

</mosaic_0001>

<llo_original>
// kernel: forward.1
$region0: #{forward.1}
  #allocation0 [shape = 'u32[]', space=smem, size = 0x4, offset = 0x4, fixed_abs, tag = 'smem constant byte address 0x4 - core index']
  #allocation1 [shape = 'u32[72,128]{1,0:T(1,128)}', space=vmem, size = 0x9000, scoped, tag = 'internal scratch']
  %s0 = inlined_call_operand.hbm [shape: f32[8,32], index: 0, kind: input, shape index: {}]
  %s1 = inlined_call_operand.hbm [shape: bf16[32,256], index: 1, kind: input, shape index: {}]
  %s2 = inlined_call_operand.vmem [shape: f32[1,256], index: 2, kind: input, shape index: {}]
  %s3 = inlined_call_operand.vmem [shape: f32[8,256], index: 3, kind: output, shape index: {}]
  %s4 = sld [smem:[#allocation0]]
  $region30: #{forward.1} parent=0
    _
  %s6 = ssub.s32 1, %s4
  %s7 = scalar_select 0, %s6, %s4
  $region1: #{forward.1} parent=0
    #allocation2 [shape = 'u8[4096]{0}', space=vmem, size = 0x1000, scoped, tag = 'input window, operand 0, single buffered']
    #allocation3 [shape = 's32[1]{0}', space=sflag, size = 0x4, scoped, tag = 'scoped memory for forward.1']
    #allocation4 [shape = 'u8[16384]{0}', space=vmem, size = 0x4000, scoped, tag = 'input window, operand 1, single buffered']
    #allocation5 [shape = 's32[1]{0}', space=sflag, size = 0x4, scoped, tag = 'scoped memory for forward.1']
    %8 = vsyncpa [#allocation3], 0
    %9 = vsyncpa [#allocation5], 0
    // Predicated region
    $region2: #{forward.1} parent=1 // pred_check
      _
    $region3: #{forward.1} parent=1 // pred_check_branch
      %11 = sbr.rel (0) target = $region5
    $region4: #{forward.1} parent=1 // pred_region
      %13 = vsyncadd [#allocation3], 0
      %s15 = sshll.u32 %s0, 4
      %s16 = int_to_ptr.hbm [resolvable:$true] %s15
      %s17 = sshll.u32 [#allocation2], 4
      %s18 = int_to_ptr.vmem [resolvable:$true] %s17
      %20 = dma.hbm_to_vmem [thread:$0]  %s16, 128, %s18, [#allocation3]
    $region5: #{forward.1} parent=1 // pred_fallthru
      _
    // Predicated region
    $region6: #{forward.1} parent=1 // pred_check
      _
    $region7: #{forward.1} parent=1 // pred_check_branch
      %22 = sbr.rel (0) target = $region9
    $region8: #{forward.1} parent=1 // pred_region
      %24 = vsyncadd [#allocation5], 0
      %s25 = sshll.u32 %s1, 4
      %s26 = int_to_ptr.hbm [resolvable:$true] %s25
      %s27 = sshll.u32 [#allocation4], 4
      %s28 = int_to_ptr.vmem [resolvable:$true] %s27
      %33 = dma.hbm_to_vmem [thread:$0]  %s26, 512, %s28, [#allocation5], 128, 128, 8
    $region9: #{forward.1} parent=1 // pred_fallthru
      _
    // Predicated region
    $region10: #{forward.1} parent=1 // pred_check
      _
    $region11: #{forward.1} parent=1 // pred_check_branch
      %35 = sbr.rel (0) target = $region13
    $region12: #{forward.1} parent=1 // pred_region
      _
    $region13: #{forward.1} parent=1 // pred_fallthru
      _
    // Predicated region
    $region14: #{forward.1} parent=1 // pred_check
      _
    $region15: #{forward.1} parent=1 // pred_check_branch
      %37 = sbr.rel (0) target = $region17
    $region16: #{forward.1} parent=1 // pred_region
      %39 = dma.done [#allocation3], 128
    $region17: #{forward.1} parent=1 // pred_fallthru
      _
    // Predicated region
    $region18: #{forward.1} parent=1 // pred_check
      _
    $region19: #{forward.1} parent=1 // pred_check_branch
      %41 = sbr.rel (0) target = $region21
    $region20: #{forward.1} parent=1 // pred_region
      %43 = dma.done [#allocation5], 512
    $region21: #{forward.1} parent=1 // pred_fallthru
      _
    %v45 = vld [vmem:[#allocation2] sm:$0xff]
    %v46 = vpack.c.bf16 %v45, %v45
    %v47 = vld [vmem:[#allocation4] sm:$0xff]
    %v48 = vld [vmem:[#allocation4 + $0x8] sm:$0xff]
    %v49 = vld [vmem:[#allocation4 + $0x10] sm:$0xff]
    %v50 = vld [vmem:[#allocation4 + $0x18] sm:$0xff]
    %v51 = vld [vmem:[%s2] sm:$0x3]
    %v53 = vperm.slane %v51, 0
    %v54 = vperm.slane %v51, 1
    %v61 = vunpack.c.l.b16 %v47
    %v62 = vunpack.c.h.b16 %v47
    %v63 = vunpack.c.l.b16 %v48
    %v64 = vunpack.c.h.b16 %v48
    %v65 = vunpack.c.l.b16 %v49
    %v66 = vunpack.c.h.b16 %v49
    %v67 = vunpack.c.l.b16 %v50
    %v68 = vunpack.c.h.b16 %v50
    %v69 = vpack.c.b16 %v63, %v61
    %v70 = vpack.c.b16 %v64, %v62
    %v71 = vpack.c.b16 %v67, %v65
    %v72 = vpack.c.b16 %v68, %v66
    %vm77 = vcmask 261120
    %v79 = vsel %vm77, %v46, 0
    %81 = vmatpush.bf16.msra.mxu0 0
    %82 = vmatpush.bf16.msra.mxu0 0
    %83 = vmatpush.bf16.msra.mxu0 0
    %84 = vmatpush.bf16.msra.mxu0 0
    %85 = vmatpush.bf16.msra.mxu0 0
    %86 = vmatpush.bf16.msra.mxu0 0
    %87 = vmatpush.bf16.msra.mxu0 %v71
    %88 = vmatpush.bf16.msra.mxu0 %v69
    %89 = vmatmul.bf16.gmra.mxu0 %v79
    %v90 = vpop.f32.mrf.mxu0
    %v91 = vadd.f32 %v53, %v90
    %v92 = vpop.f32.mrf.mxu0
    %93 = vdwg.mxu0
    %94 = vmatpush.bf16.msra.mxu0 0
    %95 = vmatpush.bf16.msra.mxu0 0
    %96 = vmatpush.bf16.msra.mxu0 0
    %97 = vmatpush.bf16.msra.mxu0 0
    %98 = vmatpush.bf16.msra.mxu0 0
    %99 = vmatpush.bf16.msra.mxu0 0
    %100 = vmatpush.bf16.msra.mxu0 %v72
    %101 = vmatpush.bf16.msra.mxu0 %v70
    %102 = vmatmul.bf16.gmra.mxu0 %v79
    %v103 = vpop.f32.mrf.mxu0
    %v104 = vadd.f32 %v54, %v103
    %v105 = vpop.f32.mrf.mxu0
    %106 = vdwg.mxu0
    %107 = vst [vmem:[%s3] sm:$0xff] %v91
    %108 = vst [vmem:[%s3 + $0x8] sm:$0xff] %v104
    // Predicated region
    $region22: #{forward.1} parent=1 // pred_check
      _
    $region23: #{forward.1} parent=1 // pred_check_branch
      %110 = sbr.rel (0) target = $region25
    $region24: #{forward.1} parent=1 // pred_region
      _
    $region25: #{forward.1} parent=1 // pred_fallthru
      _
    // Predicated region
    $region26: #{forward.1} parent=1 // pred_check
      _
    $region27: #{forward.1} parent=1 // pred_check_branch
      %112 = sbr.rel (0) target = $region29
    $region28: #{forward.1} parent=1 // pred_region
      _
    $region29: #{forward.1} parent=1 // pred_fallthru
      _
    %113 = vsyncpa [#allocation3], 1
    %114 = vsyncpa [#allocation5], 1

</llo_original>
